<compile_context>
chip_gen: v5e
topology: v5e:2x2
jax: 0.10.0
libtpu: 0.0.40
codegen_flags: <defaults>
</compile_context>

<pallas_src>
import math

import jax
import jax.numpy as jnp
import numpy as np
from jax.experimental import pallas as pl
from jax.experimental.pallas import tpu as pltpu


def _round_up(x, m):
    return (x + m - 1) // m * m


def _pick_divisor(total, candidates):
    for c in candidates:
        if c <= total and total % c == 0:
            return c
    return 128


def _vmem_budget_bytes():
    """Generation-aware VMEM budget (leave headroom for Mosaic scratch)."""
    cap = 64 * 1024 * 1024
    try:
        info = pltpu.get_tpu_info()
        cap = int(getattr(info, "vmem_capacity_bytes", cap))
    except Exception:
        pass
    # ~48 MiB on v7x (64 MiB physical), capped at ~96-100 MiB on v5e/v6e.
    return min(cap * 3 // 4, 100 * 1024 * 1024)


# ------------------------------ Pallas kernels -------------------------------

def _project_kernel(cur_ref, proj_ref, init_ref, out_ref):
    """theta_D tile = theta_D_0 tile + theta_d @ P[:, tile] (f32 accumulation)."""
    off = jnp.dot(cur_ref[...], proj_ref[...],
                  preferred_element_type=jnp.float32)
    out_ref[...] = (init_ref[...].astype(jnp.float32) + off).astype(out_ref.dtype)


def _conv_matmul_kernel(p_ref, w_ref, b_ref, o_ref):
    """Collapsed-K im2col conv tile: single MXU matmul + bias (f32 accum).

    p_ref : (TM, K)      im2col patch tile (rows = flattened N*OH*OW positions)
    w_ref : (K, TN)      HWIO-flat projected weight tile (resident across M)
    b_ref : (1, TN)      projected bias (f32)
    o_ref : (TM, TN)     lane-dense output tile
    """
    acc = jnp.dot(p_ref[...], w_ref[...], preferred_element_type=jnp.float32)
    o_ref[...] = (acc + b_ref[...]).astype(o_ref.dtype)


def _conv_matmul_kloop_kernel(p_ref, w_ref, b_ref, o_ref, acc_ref):
    """Fallback for very large K: K-tiled matmul with f32 VMEM accumulator."""
    kk = pl.program_id(2)

    @pl.when(kk == 0)
    def _init():
        acc_ref[...] = jnp.zeros_like(acc_ref)

    acc_ref[...] += jnp.dot(p_ref[...], w_ref[...],
                            preferred_element_type=jnp.float32)

    @pl.when(kk == pl.num_programs(2) - 1)
    def _finalize():
        o_ref[...] = (acc_ref[...] + b_ref[...]).astype(o_ref.dtype)


# ------------------------------ Module wrapper --------------------------------

class IntrConv2dPallas:
    """JAX/Pallas re-implementation of the PyTorch IntrConv2d (dense proj_kind)."""

    def __init__(self, key, intr_dim, in_channels, out_channels, kernel_size,
                 stride=(1, 1), padding=(0, 0), dilation=(1, 1), groups=1,
                 bias=True, dtype=jnp.float32, compute_dtype=jnp.bfloat16):
        assert groups == 1   # TODO(synk): grouped conv not implemented in this kernel
        assert bias          # TODO(synk): bias=False path not implemented
        # TODO(synk): proj_kind='sparse' (CSR random projection) not implemented
        kh, kw = kernel_size
        self.in_channels = in_channels
        self.out_channels = out_channels
        self.kernel_size = (kh, kw)
        self.stride = stride
        self.padding = padding
        self.dilation = dilation
        self.groups = groups
        self.dtype = dtype
        self.compute_dtype = compute_dtype
        self.intr_dim = intr_dim
        self._vmem_budget = _vmem_budget_bytes()

        cin_g = in_channels // groups
        d_weight = out_channels * cin_g * kh * kw

        keys = jax.random.split(key, 5)
        # kaiming_uniform_(a=sqrt(5))  ==  U(-1/sqrt(fan_in), 1/sqrt(fan_in))
        fan_in = cin_g * kh * kw
        bound = 1.0 / math.sqrt(fan_in)
        self.initial_weight = jax.random.uniform(
            keys[0], (out_channels, cin_g, kh, kw), dtype,
            minval=-bound, maxval=bound)
        # dense projection: uniform then normalize each row to unit norm
        pw = jax.random.uniform(keys[1], (intr_dim, d_weight), dtype)
        self.project_weight = pw / jnp.linalg.norm(pw, axis=1, keepdims=True)
        self.initial_bias = jax.random.uniform(keys[2], (out_channels,), dtype)
        pb = jax.random.uniform(keys[3], (intr_dim, out_channels), dtype)
        self.project_bias = pb / jnp.linalg.norm(pb, axis=1, keepdims=True)
        # trainable intrinsic parameter theta_d, shape (1, intr_dim)
        self.current = jax.random.normal(keys[4], (1, intr_dim), dtype) * 0.01

        # ---- kernel-layout projection buffers (built once at init) ----
        # Permute projection columns from OIHW-flat to HWIO-flat order, append
        # the bias columns, and zero-pad to a lane-aligned width, so a single
        # gridded matmul emits the weight already in the conv kernel's layout.
        pw_hwio = self.project_weight.reshape(intr_dim, out_channels, cin_g, kh, kw)
        pw_hwio = jnp.transpose(pw_hwio, (0, 3, 4, 2, 1)).reshape(intr_dim, d_weight)
        init_w_hwio = jnp.transpose(self.initial_weight, (2, 3, 1, 0)).reshape(1, d_weight)
        proj_cat = jnp.concatenate([pw_hwio, self.project_bias], axis=1)
        init_cat = jnp.concatenate(
            [init_w_hwio, self.initial_bias.reshape(1, -1)], axis=1)

        d_total = d_weight + out_channels
        cdt_bytes = jnp.dtype(compute_dtype).itemsize
        # Tile width sized from intr_dim so the double-buffered (intr, td) P
        # block (plus the small row blocks) stays well within the VMEM budget.
        per_col_bytes = 2 * intr_dim * cdt_bytes + 24
        max_td = max(128, (self._vmem_budget // 2) // per_col_bytes // 128 * 128)
        td = min(max_td, _round_up(d_total, 128))
        d_pad = _round_up(d_total, td)
        # P stored in the (bf16) compute dtype: projection is bound on reading P.
        self._proj_cat = jnp.pad(
            proj_cat, ((0, 0), (0, d_pad - d_total))).astype(compute_dtype)
        self._init_cat = jnp.pad(init_cat, ((0, 0), (0, d_pad - d_total)))
        self._d_weight = d_weight
        self._d_pad = d_pad
        self._td = td

    # --- plain-JAX reference of the projection (for the correctness check) ---
    def projected_params_ref(self):
        w = self.initial_weight + (self.current @ self.project_weight).reshape(
            self.initial_weight.shape)
        b = self.initial_bias + (self.current @ self.project_bias).reshape(
            self.initial_bias.shape)
        return w, b

    def __call__(self, x):
        # x: NCHW (PyTorch convention)
        n, cin, h, w_in = x.shape
        assert cin == self.in_channels
        kh, kw = self.kernel_size
        sh, sw = self.stride
        ph, pw_ = self.padding
        dh, dw = self.dilation
        cout = self.out_channels
        cin_g = cin // self.groups
        intr = self.intr_dim
        cdt = self.compute_dtype
        td, d_pad = self._td, self._d_pad

        # ---- 1) intrinsic-dim projection: gridded, lane-dense column tiles ----
        theta = pl.pallas_call(
            _project_kernel,
            out_shape=jax.ShapeDtypeStruct((1, d_pad), jnp.float32),
            grid_spec=pltpu.PrefetchScalarGridSpec(
                num_scalar_prefetch=0,
                grid=(d_pad // td,),
                in_specs=[
                    pl.BlockSpec((1, intr), lambda j: (0, 0)),
                    pl.BlockSpec((intr, td), lambda j: (0, j)),
                    pl.BlockSpec((1, td), lambda j: (0, j)),
                ],
                out_specs=pl.BlockSpec((1, td), lambda j: (0, j)),
            ),
            compiler_params=pltpu.CompilerParams(
                dimension_semantics=("parallel",),
                vmem_limit_bytes=self._vmem_budget),
        )(self.current.astype(cdt), self._proj_cat, self._init_cat)

        kkc = kh * kw * cin_g                        # conv contraction dim K
        w_flat = theta[0, :self._d_weight].reshape(kkc, cout)            # f32
        bias = theta[0, self._d_weight:self._d_weight + cout].reshape(1, cout)

        # ---- 2) im2col in the wrapper, materialized directly in bf16 ----
        # TODO(synk): fuse im2col into the conv kernel (per-tap in-VMEM shifted
        # views) to avoid the KH*KW-replicated patches array in HBM entirely.
        x_nhwc = jnp.transpose(x, (0, 2, 3, 1)).astype(cdt)
        x_pad = jnp.pad(x_nhwc, ((0, 0), (ph, ph), (pw_, pw_), (0, 0)))
        hp, wp = x_pad.shape[1], x_pad.shape[2]
        oh = (hp - dh * (kh - 1) - 1) // sh + 1
        ow = (wp - dw * (kw - 1) - 1) // sw + 1
        taps = []
        for i in range(kh):
            for j in range(kw):
                taps.append(
                    x_pad[:, i * dh: i * dh + (oh - 1) * sh + 1: sh,
                             j * dw: j * dw + (ow - 1) * sw + 1: sw, :])
        # batch flattened into the M axis: (N*OH*OW, KH*KW*Cin)
        patches = jnp.concatenate(taps, axis=-1).reshape(n * oh * ow, kkc)

        # ---- 3) generation-aware tile plan ----
        out_dtype = x.dtype
        cdt_bytes = jnp.dtype(cdt).itemsize
        out_bytes = jnp.dtype(out_dtype).itemsize
        m_total = n * oh * ow
        cout_pad = _round_up(cout, 128)
        TN = cout_pad if cout_pad <= 512 else _pick_divisor(
            cout_pad, (512, 384, 256, 128))
        TM = min(512, _round_up(m_total, 256))
        k_pad = _round_up(kkc, 16)          # sublane-aligned only; no 128 blowup
        limit = int(self._vmem_budget * 0.7)

        def footprint(tm, kp, tn, extra=0):
            patches_blk = tm * max(kp, 128) * cdt_bytes   # lanes pad to 128 in VMEM
            weight_blk = _round_up(kp, 8) * tn * cdt_bytes
            bias_blk = 8 * tn * 4
            out_blk = tm * tn * out_bytes
            return 2 * (patches_blk + weight_blk + bias_blk + out_blk) + extra

        use_kloop = False
        tk = k_pad
        if footprint(TM, k_pad, TN) > limit and TM > 256:
            TM = 256
        if footprint(TM, k_pad, TN) > limit:
            use_kloop = True
            tk = 512
            while footprint(TM, tk, TN, extra=TM * TN * 4) > limit and tk > 128:
                tk //= 2
            k_pad = _round_up(kkc, tk)

        m_pad = _round_up(m_total, TM)
        num_i = m_pad // TM
        num_j = cout_pad // TN

        patches = jnp.pad(patches, ((0, m_pad - m_total), (0, k_pad - kkc)))
        w_mat = jnp.pad(
            w_flat, ((0, k_pad - kkc), (0, cout_pad - cout))).astype(cdt)
        b_mat = jnp.pad(bias, ((0, 0), (0, cout_pad - cout)))   # stays f32

        # ---- 4) conv as a matmul over the flattened batch*spatial M axis ----
        if not use_kloop and num_j == 1:
            # Collapsed K and collapsed Cout: weight + bias fully VMEM-resident
            # (constant index maps), patches streamed once, single parallel axis.
            out_pad = pl.pallas_call(
                _conv_matmul_kernel,
                out_shape=jax.ShapeDtypeStruct((m_pad, cout_pad), out_dtype),
                grid_spec=pltpu.PrefetchScalarGridSpec(
                    num_scalar_prefetch=0,
                    grid=(num_i,),
                    in_specs=[
                        pl.BlockSpec((TM, k_pad), lambda i: (i, 0)),
                        pl.BlockSpec((k_pad, cout_pad), lambda i: (0, 0)),
                        pl.BlockSpec((1, cout_pad), lambda i: (0, 0)),
                    ],
                    out_specs=pl.BlockSpec((TM, cout_pad), lambda i: (i, 0)),
                ),
                compiler_params=pltpu.CompilerParams(
                    dimension_semantics=("parallel",),
                    vmem_limit_bytes=self._vmem_budget),
            )(patches, w_mat, b_mat)
        elif not use_kloop:
            # Collapsed K, Cout tiled: j outermost so each weight tile is
            # fetched once and reused across the whole inner M sweep.
            out_pad = pl.pallas_call(
                _conv_matmul_kernel,
                out_shape=jax.ShapeDtypeStruct((m_pad, cout_pad), out_dtype),
                grid_spec=pltpu.PrefetchScalarGridSpec(
                    num_scalar_prefetch=0,
                    grid=(num_j, num_i),
                    in_specs=[
                        pl.BlockSpec((TM, k_pad), lambda j, i: (i, 0)),
                        pl.BlockSpec((k_pad, TN), lambda j, i: (0, j)),
                        pl.BlockSpec((1, TN), lambda j, i: (0, j)),
                    ],
                    out_specs=pl.BlockSpec((TM, TN), lambda j, i: (i, j)),
                ),
                compiler_params=pltpu.CompilerParams(
                    dimension_semantics=("parallel", "parallel"),
                    vmem_limit_bytes=self._vmem_budget),
            )(patches, w_mat, b_mat)
        else:
            # Very large K fallback: trailing "arbitrary" reduction axis with a
            # f32 VMEM accumulator.
            num_k = k_pad // tk
            out_pad = pl.pallas_call(
                _conv_matmul_kloop_kernel,
                out_shape=jax.ShapeDtypeStruct((m_pad, cout_pad), out_dtype),
                grid_spec=pltpu.PrefetchScalarGridSpec(
                    num_scalar_prefetch=0,
                    grid=(num_j, num_i, num_k),
                    in_specs=[
                        pl.BlockSpec((TM, tk), lambda j, i, k: (i, k)),
                        pl.BlockSpec((tk, TN), lambda j, i, k: (k, j)),
                        pl.BlockSpec((1, TN), lambda j, i, k: (0, j)),
                    ],
                    out_specs=pl.BlockSpec((TM, TN), lambda j, i, k: (i, j)),
                    scratch_shapes=[pltpu.VMEM((TM, TN), jnp.float32)],
                ),
                compiler_params=pltpu.CompilerParams(
                    dimension_semantics=("parallel", "parallel", "arbitrary"),
                    vmem_limit_bytes=self._vmem_budget),
            )(patches, w_mat, b_mat)

        # out_pad is (N*OH*OW padded, Cout padded), lane-dense along Cout.
        # NCHW via one XLA permute (cheaper than per-tile XLU transposes once
        # the K loop is collapsed).
        out = out_pad[:m_total, :cout].reshape(n, oh, ow, cout)
        return jnp.transpose(out, (0, 3, 1, 2)).astype(x.dtype)


# ------------------------------------ main ------------------------------------

if __name__ == "__main__":
    key = jax.random.PRNGKey(0)
    k_mod, k_x = jax.random.split(key)

    module = IntrConv2dPallas(
        k_mod, intr_dim=16, in_channels=4, out_channels=8,
        kernel_size=(3, 3), stride=(1, 1), padding=(1, 1), dilation=(1, 1),
        groups=1, bias=True)

    x = jax.random.normal(k_x, (2, 4, 16, 16), jnp.float32)  # NCHW

    out = module(x)
    jax.block_until_ready(out)

    # reference: plain-JAX f32 projection + lax conv
    w_ref, b_ref = module.projected_params_ref()
    ref = jax.lax.conv_general_dilated(
        x, w_ref, window_strides=(1, 1), padding=[(1, 1), (1, 1)],
        rhs_dilation=(1, 1),
        dimension_numbers=("NCHW", "OIHW", "NCHW")) + b_ref[None, :, None, None]
    # bf16 operands with f32 accumulation -> ~1e-2 level error vs the f32 reference.
    np.testing.assert_allclose(np.asarray(out), np.asarray(ref),
                               rtol=2e-2, atol=2e-2)

    print("KERNEL_OK")
</pallas_src>

<mosaic_0001>
module attributes {stable_mosaic.version = 11 : i64} {
  func.func @_project_kernel(%arg0: i32, %arg1: memref<1x16xbf16, #tpu.memory_space<vmem>>, %arg2: memref<16x384xbf16, #tpu.memory_space<vmem>>, %arg3: memref<1x384xf32, #tpu.memory_space<vmem>>, %arg4: memref<1x384xf32, #tpu.memory_space<vmem>>) attributes {dimension_semantics = [#tpu.dimension_semantics<parallel>], iteration_bounds = array<i64: 1>, scalar_prefetch = 0 : i64, scratch_operands = 0 : i64, tpu.core_type = #tpu.core_type<tc>, window_params = [{pipeline_mode = #tpu.pipeline_mode<synchronous>, transform_indices = @transform_0, window_bounds = array<i64: 1, 16>}, {transform_indices = @transform_1, window_bounds = array<i64: 16, 384>}, {transform_indices = @transform_2, window_bounds = array<i64: 1, 384>}, {transform_indices = @transform_3, window_bounds = array<i64: 1, 384>}]} {
    %c0 = arith.constant 0 : index
    %c0_0 = arith.constant 0 : index
    %0 = vector.load %arg1[%c0, %c0_0] : memref<1x16xbf16, #tpu.memory_space<vmem>>, vector<1x16xbf16>
    %c0_1 = arith.constant 0 : index
    %c0_2 = arith.constant 0 : index
    %1 = vector.load %arg2[%c0_1, %c0_2] : memref<16x384xbf16, #tpu.memory_space<vmem>>, vector<16x384xbf16>
    %cst = arith.constant dense<0.000000e+00> : vector<1x384xf32>
    %2 = tpu.matmul %0, %1, %cst {dimension_numbers = #tpu.dot_dimension_numbers<[1], [0], [0], [1], [0, 0, 1, 1], [], []>} : vector<1x16xbf16>, vector<16x384xbf16>, vector<1x384xf32> -> vector<1x384xf32>
    %c0_3 = arith.constant 0 : index
    %c0_4 = arith.constant 0 : index
    %3 = vector.load %arg3[%c0_3, %c0_4] : memref<1x384xf32, #tpu.memory_space<vmem>>, vector<1x384xf32>
    %4 = arith.addf %3, %2 : vector<1x384xf32>
    %c0_5 = arith.constant 0 : index
    %c0_6 = arith.constant 0 : index
    %5 = vector.load %arg4[%c0_5, %c0_6] : memref<1x384xf32, #tpu.memory_space<vmem>>, vector<1x384xf32>
    tpu.vector_store %arg4[%c0_5, %c0_6], %4 {strides = array<i32>} : memref<1x384xf32, #tpu.memory_space<vmem>>, vector<1x384xf32>,
    return
  }
  func.func @transform_0(%arg0: i32) -> (i32, i32) {
    %c0_i32 = arith.constant 0 : i32
    %c0_i32_0 = arith.constant 0 : i32
    %c0_i32_1 = arith.constant 0 : i32
    return %c0_i32, %c0_i32_0 : i32, i32
  }
  func.func @transform_1(%arg0: i32) -> (i32, i32) {
    %c0_i32 = arith.constant 0 : i32
    %c0_i32_0 = arith.constant 0 : i32
    return %c0_i32, %arg0 : i32, i32
  }
  func.func @transform_2(%arg0: i32) -> (i32, i32) {
    %c0_i32 = arith.constant 0 : i32
    %c0_i32_0 = arith.constant 0 : i32
    return %c0_i32, %arg0 : i32, i32
  }
  func.func @transform_3(%arg0: i32) -> (i32, i32) {
    %c0_i32 = arith.constant 0 : i32
    %c0_i32_0 = arith.constant 0 : i32
    return %c0_i32, %arg0 : i32, i32
  }
}

</mosaic_0001>

<llo_original>
// kernel: tpu_custom_call.1
$region0: #{tpu_custom_call.1}
  #allocation0 [shape = 'u32[]', space=smem, size = 0x4, offset = 0x4, fixed_abs, tag = 'smem constant byte address 0x4 - core index']
  #allocation1 [shape = 'u32[72,128]{1,0:T(1,128)}', space=vmem, size = 0x9000, scoped, tag = 'internal scratch']
  %s0 = inlined_call_operand.hbm [shape: bf16[1,16], index: 0, kind: input, shape index: {}]
  %s1 = inlined_call_operand.hbm [shape: bf16[16,384], index: 1, kind: input, shape index: {}]
  %s2 = inlined_call_operand.hbm [shape: f32[1,384], index: 2, kind: input, shape index: {}]
  %s3 = inlined_call_operand.hbm [shape: f32[1,384], index: 3, kind: output, shape index: {}]
  %s4 = sld [smem:[#allocation0]]
  $region34: #{tpu_custom_call.1} parent=0
    _
  %s6 = ssub.s32 1, %s4
  %s7 = scalar_select 0, %s6, %s4
  $region1: #{tpu_custom_call.1} parent=0
    #allocation2 [shape = 'u8[512]{0}', space=vmem, size = 0x400, scoped, tag = 'input window, operand 0, single buffered']
    #allocation3 [shape = 's32[1]{0}', space=sflag, size = 0x4, scoped, tag = 'scoped memory for tpu_custom_call.1']
    #allocation4 [shape = 's32[1]{0}', space=sflag, size = 0x4, scoped, tag = 'scoped memory for tpu_custom_call.1']
    #allocation5 [shape = 'u8[12288]{0}', space=vmem, size = 0x3000, scoped, tag = 'input window, operand 1, single buffered']
    #allocation6 [shape = 's32[1]{0}', space=sflag, size = 0x4, scoped, tag = 'scoped memory for tpu_custom_call.1']
    #allocation7 [shape = 'u8[1536]{0}', space=vmem, size = 0x800, scoped, tag = 'input window, operand 2, single buffered']
    #allocation8 [shape = 'u8[1536]{0}', space=vmem, size = 0x800, scoped, tag = 'output window, operand 0, single buffered']
    %8 = vsyncpa [#allocation3], 0
    %9 = vsyncpa [#allocation6], 0
    %10 = vsyncpa [#allocation4], 0
    // Predicated region
    $region2: #{tpu_custom_call.1} parent=1 // pred_check
      _
    $region3: #{tpu_custom_call.1} parent=1 // pred_check_branch
      %12 = sbr.rel (0) target = $region5
    $region4: #{tpu_custom_call.1} parent=1 // pred_region
      %14 = vsyncadd [#allocation3], 0
      %s16 = sshll.u32 %s0, 4
      %s17 = int_to_ptr.hbm [resolvable:$true] %s16
      %s18 = sshll.u32 [#allocation2], 4
      %s19 = int_to_ptr.vmem [resolvable:$true] %s18
      %21 = dma.hbm_to_vmem [thread:$0]  %s17, 16, %s19, [#allocation3]
    $region5: #{tpu_custom_call.1} parent=1 // pred_fallthru
      _
    // Predicated region
    $region6: #{tpu_custom_call.1} parent=1 // pred_check
      _
    $region7: #{tpu_custom_call.1} parent=1 // pred_check_branch
      %23 = sbr.rel (0) target = $region9
    $region8: #{tpu_custom_call.1} parent=1 // pred_region
      %25 = vsyncadd [#allocation6], 0
      %s26 = sshll.u32 %s1, 4
      %s27 = int_to_ptr.hbm [resolvable:$true] %s26
      %s28 = sshll.u32 [#allocation5], 4
      %s29 = int_to_ptr.vmem [resolvable:$true] %s28
      %34 = dma.hbm_to_vmem [thread:$0]  %s27, 384, %s29, [#allocation6], 192, 192, 12
    $region9: #{tpu_custom_call.1} parent=1 // pred_fallthru
      _
    // Predicated region
    $region10: #{tpu_custom_call.1} parent=1 // pred_check
      _
    $region11: #{tpu_custom_call.1} parent=1 // pred_check_branch
      %36 = sbr.rel (0) target = $region13
    $region12: #{tpu_custom_call.1} parent=1 // pred_region
      %38 = vsyncadd [#allocation6], 0
      %s40 = sshll.u32 %s2, 4
      %s41 = int_to_ptr.hbm [resolvable:$true] %s40
      %s42 = sshll.u32 [#allocation7], 4
      %s43 = int_to_ptr.vmem [resolvable:$true] %s42
      %45 = dma.hbm_to_vmem [thread:$0]  %s41, 48, %s43, [#allocation6]
    $region13: #{tpu_custom_call.1} parent=1 // pred_fallthru
      _
    // Predicated region
    $region14: #{tpu_custom_call.1} parent=1 // pred_check
      _
    $region15: #{tpu_custom_call.1} parent=1 // pred_check_branch
      %47 = sbr.rel (0) target = $region17
    $region16: #{tpu_custom_call.1} parent=1 // pred_region
      %49 = dma.done [#allocation3], 16
    $region17: #{tpu_custom_call.1} parent=1 // pred_fallthru
      _
    // Predicated region
    $region18: #{tpu_custom_call.1} parent=1 // pred_check
      _
    $region19: #{tpu_custom_call.1} parent=1 // pred_check_branch
      %51 = sbr.rel (0) target = $region21
    $region20: #{tpu_custom_call.1} parent=1 // pred_region
      %53 = dma.done [#allocation6], 384
    $region21: #{tpu_custom_call.1} parent=1 // pred_fallthru
      _
    // Predicated region
    $region22: #{tpu_custom_call.1} parent=1 // pred_check
      _
    $region23: #{tpu_custom_call.1} parent=1 // pred_check_branch
      %55 = sbr.rel (0) target = $region25
    $region24: #{tpu_custom_call.1} parent=1 // pred_region
      %57 = dma.done [#allocation6], 48
    $region25: #{tpu_custom_call.1} parent=1 // pred_fallthru
      _
    %v59 = vld [vmem:[#allocation2] sm:$0x1]
    %v60 = vld [vmem:[#allocation5] sm:$0xff]
    %v61 = vld [vmem:[#allocation5 + $0x8] sm:$0xf]
    %v62 = vld [vmem:[#allocation5 + $0xc] sm:$0xff]
    %v63 = vld [vmem:[#allocation5 + $0x14] sm:$0xf]
    %v68 = vunpack.c.l.b16 %v60
    %v69 = vunpack.c.h.b16 %v60
    %v70 = vunpack.c.l.b16 %v61
    %v71 = vunpack.c.l.b16 %v62
    %v72 = vunpack.c.h.b16 %v62
    %v73 = vunpack.c.l.b16 %v63
    %v74 = vpack.c.b16 %v71, %v68
    %v75 = vpack.c.b16 %v72, %v69
    %v76 = vpack.c.b16 %v73, %v70
    %vm80 = vcmask 130048
    %v82 = vsel %vm80, %v59, 0
    %84 = vmatpush.bf16.msra.mxu0 0
    %85 = vmatpush.bf16.msra.mxu0 0
    %86 = vmatpush.bf16.msra.mxu0 0
    %87 = vmatpush.bf16.msra.mxu0 0
    %88 = vmatpush.bf16.msra.mxu0 0
    %89 = vmatpush.bf16.msra.mxu0 0
    %90 = vmatpush.bf16.msra.mxu0 0
    %91 = vmatpush.bf16.msra.mxu0 %v74
    %92 = vmatmul.bf16.gmra.mxu0 %v82
    %v93 = vpop.f32.mrf.mxu0
    %v94 = vadd.f32 0.0, %v93
    %v95 = vpop.f32.mrf.mxu0
    %96 = vdwg.mxu0
    %97 = vmatpush.bf16.msra.mxu0 0
    %98 = vmatpush.bf16.msra.mxu0 0
    %99 = vmatpush.bf16.msra.mxu0 0
    %100 = vmatpush.bf16.msra.mxu0 0
    %101 = vmatpush.bf16.msra.mxu0 0
    %102 = vmatpush.bf16.msra.mxu0 0
    %103 = vmatpush.bf16.msra.mxu0 0
    %104 = vmatpush.bf16.msra.mxu0 %v75
    %105 = vmatmul.bf16.gmra.mxu0 %v82
    %v106 = vpop.f32.mrf.mxu0
    %v107 = vadd.f32 0.0, %v106
    %v108 = vpop.f32.mrf.mxu0
    %109 = vdwg.mxu0
    %110 = vmatpush.bf16.msra.mxu0 0
    %111 = vmatpush.bf16.msra.mxu0 0
    %112 = vmatpush.bf16.msra.mxu0 0
    %113 = vmatpush.bf16.msra.mxu0 0
    %114 = vmatpush.bf16.msra.mxu0 0
    %115 = vmatpush.bf16.msra.mxu0 0
    %116 = vmatpush.bf16.msra.mxu0 0
    %117 = vmatpush.bf16.msra.mxu0 %v76
    %118 = vmatmul.bf16.gmra.mxu0 %v82
    %v119 = vpop.f32.mrf.mxu0
    %v120 = vadd.f32 0.0, %v119
    %v121 = vpop.f32.mrf.mxu0
    %122 = vdwg.mxu0
    %v123 = vld [vmem:[#allocation7] sm:$0x7]
    %v127 = vrot.slane %v107, 7
    %v128 = vrot.slane %v120, 6
    %vm129 = vcmask 1040384
    %v130 = vsel %vm129, %v94, %v127
    %vm131 = vcmask 1041408
    %v132 = vsel %vm131, %v130, %v128
    %v134 = vadd.f32 %v123, %v132
    %v135 = vlaneseq
    %vm136 = vcmp.ge.s32.totalorder %v135, 0
    %vm137 = vcmp.lt.s32.totalorder %v135, 384
    %vm138 = vmand %vm136, %vm137
    %139 = vst.msk [vmem:[#allocation8] sm:$0x7] %vm138, %v134
    // Predicated region
    $region26: #{tpu_custom_call.1} parent=1 // pred_check
      _
    $region27: #{tpu_custom_call.1} parent=1 // pred_check_branch
      %141 = sbr.rel (0) target = $region29
    $region28: #{tpu_custom_call.1} parent=1 // pred_region
      %143 = vsyncadd [#allocation4], 0
      %s145 = sshll.u32 [#allocation8], 4
      %s146 = int_to_ptr.vmem [resolvable:$true] %s145
      %s147 = sshll.u32 %s3, 4
      %s148 = int_to_ptr.hbm [resolvable:$true] %s147
      %150 = dma.vmem_to_hbm [thread:$0]  %s146, 48, %s148, [#allocation4]
    $region29: #{tpu_custom_call.1} parent=1 // pred_fallthru
      _
    // Predicated region
    $region30: #{tpu_custom_call.1} parent=1 // pred_check
      _
    $region31: #{tpu_custom_call.1} parent=1 // pred_check_branch
      %152 = sbr.rel (0) target = $region33
    $region32: #{tpu_custom_call.1} parent=1 // pred_region
      %154 = dma.done [#allocation4], 48
    $region33: #{tpu_custom_call.1} parent=1 // pred_fallthru
      _
    %155 = vsyncpa [#allocation3], 1
    %156 = vsyncpa [#allocation6], 1
    %157 = vsyncpa [#allocation4], 1

</llo_original>
